<compile_context>
chip_gen: v6e
topology: v6e:2x2x1
jax: 0.10.0
libtpu: 0.0.40
codegen_flags: <defaults>
</compile_context>

<pallas_src>
import functools

import jax
import jax.numpy as jnp
from jax.experimental import pallas as pl
from jax.experimental.pallas import tpu as pltpu


# ----------------------------- fused kernel -----------------------------

def fused_decoder_kernel(x_ref, h_ref, wih_ref, whh_ref, bih_ref, bhh_ref,
                         wout_ref, bout_ref, logits_ref, hout_ref):
    """One vocab tile of the decode step; the tiny GRU cell is recomputed per tile.

    Grid-invariant (resident) refs:
      x_ref:    (B, H)   embedded token, weight dtype (e.g. bf16)
      h_ref:    (B, H)   previous hidden state, f32
      wih_ref:  (H, 3H)  W_ih^T (gate order r, z, n — PyTorch layout)
      whh_ref:  (H, 3H)  W_hh^T
      bih_ref:  (1, 3H)  f32
      bhh_ref:  (1, 3H)  f32
    Per-tile (streamed) refs:
      wout_ref: (H, TILE_V)  contiguous vocab slab of W_out^T
      bout_ref: (1, TILE_V)  f32
      logits_ref: (B, TILE_V)
      hout_ref:   (B, H)     per-tile copy of the new hidden state
    """
    f32 = jnp.float32
    mxu_dt = wih_ref.dtype                       # bf16 (or f32) — keep MXU operands uniform
    H = h_ref.shape[-1]

    x = x_ref[...].astype(mxu_dt)
    h32 = h_ref[...].astype(f32)
    h = h32.astype(mxu_dt)

    # Merged gate matmuls: one MXU op per weight matrix (lane-dense N = 3H), f32 accumulate.
    gi = jnp.dot(x, wih_ref[...], preferred_element_type=f32) + bih_ref[...]
    gh = jnp.dot(h, whh_ref[...], preferred_element_type=f32) + bhh_ref[...]

    # Static, lane-aligned gate slices (H is a multiple of 128). Elementwise math in f32.
    ir, iz, inn = gi[:, 0:H], gi[:, H:2 * H], gi[:, 2 * H:3 * H]
    hr, hz, hn = gh[:, 0:H], gh[:, H:2 * H], gh[:, 2 * H:3 * H]
    r = jax.nn.sigmoid(ir + hr)
    z = jax.nn.sigmoid(iz + hz)
    n = jnp.tanh(inn + r * hn)
    h_new = (1.0 - z) * n + z * h32              # f32

    hout_ref[...] = h_new.astype(hout_ref.dtype)

    # Output projection for this vocab tile (weight-streaming bound part).
    logits_ref[...] = (
        jnp.dot(h_new.astype(wout_ref.dtype), wout_ref[...], preferred_element_type=f32)
        + bout_ref[...]
    ).astype(logits_ref.dtype)


# ----------------------------- sizing helpers -----------------------------

def _vmem_budget_bytes():
    """VMEM budget from the actual chip (v7x: 64 MiB, v5e/v6e: 128 MiB), with safe fallback."""
    try:
        info = pltpu.get_tpu_info()
        cap = getattr(info, "vmem_capacity_bytes", None)
        if cap:
            return min(int(0.75 * cap), 96 * 1024 * 1024)
    except Exception:
        pass
    return 48 * 1024 * 1024   # conservative: <= 0.75 * 64 MiB (v7x), well under v5e/v6e


def choose_tile_v(V, H, batch, weight_itemsize, vmem_budget_bytes, max_tile=2048):
    """Largest vocab tile (multiple of 128, divides V, >= 2 tiles when possible) fitting VMEM."""
    upper = min(max_tile, V if V < 256 else V // 2)   # keep >= 2 tiles for megacore when possible
    cand = [t for t in range(128, upper + 1, 128) if V % t == 0]
    if not cand:
        return V                                      # tiny vocab: single full-width tile

    def footprint(t):
        resident = (2 * H * 3 * H) * weight_itemsize + 2 * (3 * H) * 4 + 2 * batch * H * 4
        streamed = 2 * (H * t * weight_itemsize + t * 4)        # double-buffered W_out + bias tiles
        outputs = 2 * (batch * t * 4 + batch * H * 4)           # double-buffered logits + hidden tiles
        return resident + streamed + outputs

    for t in sorted(cand, reverse=True):
        if footprint(t) <= 0.7 * vmem_budget_bytes:
            return t
    return cand[0]


# ----------------------------- param prep & wrapper -----------------------------

def prepare_params(raw, tile_v=None, weight_dtype=jnp.bfloat16, batch_hint=8, max_tile=2048):
    """One-time weight re-layout, hoisted out of the per-token forward path.

    * transposes W_ih / W_hh / W_out, packs biases,
    * casts weights to `weight_dtype` (bf16 halves HBM weight-streaming bytes),
    * pre-tiles W_out^T / b_out into contiguous (nt, H, tile_v) / (nt, 1, tile_v) slabs.
    """
    V, H = raw["w_out"].shape
    itemsize = jnp.dtype(weight_dtype).itemsize
    if tile_v is None:
        tile_v = choose_tile_v(V, H, batch_hint, itemsize, _vmem_budget_bytes(), max_tile)
    tile_v = min(tile_v, V)
    assert V % tile_v == 0, "tile_v must divide the output (vocab) size"
    nt = V // tile_v

    wout_t = raw["w_out"].T.astype(weight_dtype)                 # (H, V)
    wout_tiles = wout_t.reshape(H, nt, tile_v).transpose(1, 0, 2)  # (nt, H, tile_v) contiguous slabs
    bout_tiles = raw["b_out"].astype(jnp.float32).reshape(nt, 1, tile_v)

    return {
        "embedding": raw["embedding"].astype(weight_dtype),      # (vocab, H)
        "wih_t": raw["w_ih"].T.astype(weight_dtype),             # (H, 3H)
        "whh_t": raw["w_hh"].T.astype(weight_dtype),             # (H, 3H)
        "bih": raw["b_ih"][None, :].astype(jnp.float32),         # (1, 3H)
        "bhh": raw["b_hh"][None, :].astype(jnp.float32),         # (1, 3H)
        "wout_tiles": wout_tiles,                                # (nt, H, tile_v)
        "bout_tiles": bout_tiles,                                # (nt, 1, tile_v)
    }


@functools.partial(jax.jit, static_argnames=("logits_dtype",))
def decoder_forward(prepped, input_seq, last_hidden, logits_dtype=jnp.float32):
    """Mirrors DecoderRNN.forward for a single decode step.

    input_seq:   (1, B) int32 token ids
    last_hidden: (1, B, H) float32   (n_layers = 1)
    returns: output (B, V) logits, hidden (1, B, H)
    """
    # Glue in plain JAX: embedding gather; dropout layers are identity at inference.
    x = prepped["embedding"][input_seq[0]]                 # (B, H) in weight dtype (bf16)
    h_prev = last_hidden[0].astype(jnp.float32)            # (B, H)
    B, H = h_prev.shape
    nt, _, tile_v = prepped["wout_tiles"].shape
    V = nt * tile_v

    logits, h_tiles = pl.pallas_call(
        fused_decoder_kernel,
        grid=(nt,),
        in_specs=[
            pl.BlockSpec((B, H), lambda j: (0, 0)),                 # x        (grid-invariant)
            pl.BlockSpec((B, H), lambda j: (0, 0)),                 # h_prev   (grid-invariant)
            pl.BlockSpec((H, 3 * H), lambda j: (0, 0)),             # W_ih^T   (resident)
            pl.BlockSpec((H, 3 * H), lambda j: (0, 0)),             # W_hh^T   (resident)
            pl.BlockSpec((1, 3 * H), lambda j: (0, 0)),             # b_ih
            pl.BlockSpec((1, 3 * H), lambda j: (0, 0)),             # b_hh
            pl.BlockSpec((None, H, tile_v), lambda j: (j, 0, 0)),   # W_out^T tile (contiguous)
            pl.BlockSpec((None, 1, tile_v), lambda j: (j, 0, 0)),   # b_out tile
        ],
        out_specs=[
            pl.BlockSpec((B, tile_v), lambda j: (0, j)),            # lane-dense logits tile
            pl.BlockSpec((None, B, H), lambda j: (j, 0, 0)),        # per-tile copy of h_new
        ],
        out_shape=[
            jax.ShapeDtypeStruct((B, V), logits_dtype),
            jax.ShapeDtypeStruct((nt, B, H), jnp.float32),
        ],
        compiler_params=pltpu.CompilerParams(
            dimension_semantics=("parallel",),                      # shard vocab tiles across TCs
            vmem_limit_bytes=_vmem_budget_bytes(),                  # derived from the actual chip
        ),
    )(x, h_prev, prepped["wih_t"], prepped["whh_t"], prepped["bih"], prepped["bhh"],
      prepped["wout_tiles"], prepped["bout_tiles"])

    return logits, h_tiles[0][None, :, :]


# ----------------------------- reference & params -----------------------------

def reference_forward(raw, input_seq, last_hidden, weight_dtype=jnp.float32):
    """Pure-JAX mirror of DecoderRNN.forward (eval mode).

    With weight_dtype=float32 this is exactly the PyTorch math; with bfloat16 it mirrors
    the kernel's quantization (bf16 MXU operands, f32 accumulation and elementwise math).
    """
    wd = weight_dtype
    x = raw["embedding"].astype(wd)[input_seq[0]]             # (B, H); dropout = identity
    h = last_hidden[0].astype(jnp.float32)                    # (B, H)
    gi = jnp.dot(x.astype(wd), raw["w_ih"].T.astype(wd),
                 preferred_element_type=jnp.float32) + raw["b_ih"]
    gh = jnp.dot(h.astype(wd), raw["w_hh"].T.astype(wd),
                 preferred_element_type=jnp.float32) + raw["b_hh"]
    ir, iz, inn = jnp.split(gi, 3, axis=1)
    hr, hz, hn = jnp.split(gh, 3, axis=1)
    r = jax.nn.sigmoid(ir + hr)
    z = jax.nn.sigmoid(iz + hz)
    n = jnp.tanh(inn + r * hn)
    h_new = (1.0 - z) * n + z * h
    out = jnp.dot(h_new.astype(wd), raw["w_out"].T.astype(wd),
                  preferred_element_type=jnp.float32) + raw["b_out"]   # raw logits (no softmax)
    return out, h_new[None]


def init_params(key, vocab, hidden_size, output_size):
    """Rough analogue of DecoderRNN.init_weights (raw PyTorch-layout parameters)."""
    H, V = hidden_size, output_size
    ks = jax.random.split(key, 4)
    initrange = 0.1
    return {
        "embedding": jax.random.uniform(ks[0], (vocab, H), jnp.float32, -initrange, initrange),
        "w_ih": jax.random.normal(ks[1], (3 * H, H), jnp.float32) / jnp.sqrt(H),
        "w_hh": jax.random.normal(ks[2], (3 * H, H), jnp.float32) / jnp.sqrt(H),
        "b_ih": jnp.zeros((3 * H,), jnp.float32),
        "b_hh": jnp.zeros((3 * H,), jnp.float32),
        "w_out": jax.random.uniform(ks[3], (V, H), jnp.float32, -initrange, initrange),
        "b_out": jnp.zeros((V,), jnp.float32),
    }


if __name__ == "__main__":
    # Hardware-shaped small demo: B multiple of 8 (sublane), H / V multiples of 128 (lane).
    # V = 1024 -> auto tile_v = 512 -> 2 vocab tiles (megacore split on v7x).
    B, H, V, VOCAB = 8, 128, 1024, 512

    key = jax.random.PRNGKey(0)
    kp, k1, k2 = jax.random.split(key, 3)

    raw_params = init_params(kp, VOCAB, H, V)
    prepped = prepare_params(raw_params, batch_hint=B)        # one-time re-layout, bf16 weights

    input_seq = jax.random.randint(k1, (1, B), 0, VOCAB, dtype=jnp.int32)   # (1, B)
    last_hidden = jax.random.normal(k2, (1, B, H), jnp.float32)             # (layers, B, H)

    out, hidden = decoder_forward(prepped, input_seq, last_hidden)
    jax.block_until_ready((out, hidden))

    # Compare against a reference with matching bf16 weight quantization (f32 accumulation).
    ref_out, ref_hidden = reference_forward(raw_params, input_seq, last_hidden,
                                            weight_dtype=jnp.bfloat16)

    assert out.shape == (B, V) and hidden.shape == (1, B, H)
    assert jnp.allclose(out, ref_out, atol=1e-2, rtol=1e-2)
    assert jnp.allclose(hidden, ref_hidden, atol=1e-2, rtol=1e-2)
    assert bool(jnp.isfinite(out).all())

    print("KERNEL_OK")
</pallas_src>

<mosaic_0001>
module attributes {stable_mosaic.version = 11 : i64} {
  func.func @fused_decoder_kernel(%arg0: i32, %arg1: memref<8x128xbf16, #tpu.memory_space<vmem>>, %arg2: memref<8x128xf32, #tpu.memory_space<vmem>>, %arg3: memref<128x384xbf16, #tpu.memory_space<vmem>>, %arg4: memref<128x384xbf16, #tpu.memory_space<vmem>>, %arg5: memref<1x384xf32, #tpu.memory_space<vmem>>, %arg6: memref<1x384xf32, #tpu.memory_space<vmem>>, %arg7: memref<1x128x512xbf16, #tpu.memory_space<vmem>>, %arg8: memref<1x1x512xf32, #tpu.memory_space<vmem>>, %arg9: memref<8x512xf32, #tpu.memory_space<vmem>>, %arg10: memref<1x8x128xf32, #tpu.memory_space<vmem>>) attributes {dimension_semantics = [#tpu.dimension_semantics<parallel>], iteration_bounds = array<i64: 2>, scalar_prefetch = 0 : i64, scratch_operands = 0 : i64, tpu.core_type = #tpu.core_type<tc>, window_params = [{pipeline_mode = #tpu.pipeline_mode<synchronous>, transform_indices = @transform_0, window_bounds = array<i64: 8, 128>}, {pipeline_mode = #tpu.pipeline_mode<synchronous>, transform_indices = @transform_1, window_bounds = array<i64: 8, 128>}, {pipeline_mode = #tpu.pipeline_mode<synchronous>, transform_indices = @transform_2, window_bounds = array<i64: 128, 384>}, {pipeline_mode = #tpu.pipeline_mode<synchronous>, transform_indices = @transform_3, window_bounds = array<i64: 128, 384>}, {pipeline_mode = #tpu.pipeline_mode<synchronous>, transform_indices = @transform_4, window_bounds = array<i64: 1, 384>}, {pipeline_mode = #tpu.pipeline_mode<synchronous>, transform_indices = @transform_5, window_bounds = array<i64: 1, 384>}, {transform_indices = @transform_6, window_bounds = array<i64: 1, 128, 512>}, {transform_indices = @transform_7, window_bounds = array<i64: 1, 1, 512>}, {transform_indices = @transform_8, window_bounds = array<i64: 8, 512>}, {transform_indices = @transform_9, window_bounds = array<i64: 1, 8, 128>}]} {
    %c0 = arith.constant 0 : index
    %c0_0 = arith.constant 0 : index
    %0 = vector.load %arg1[%c0, %c0_0] : memref<8x128xbf16, #tpu.memory_space<vmem>>, vector<8x128xbf16>
    %c0_1 = arith.constant 0 : index
    %c0_2 = arith.constant 0 : index
    %1 = vector.load %arg2[%c0_1, %c0_2] : memref<8x128xf32, #tpu.memory_space<vmem>>, vector<8x128xf32>
    %2 = arith.truncf %1 : vector<8x128xf32> to vector<8x128xbf16>
    %c0_3 = arith.constant 0 : index
    %c0_4 = arith.constant 0 : index
    %3 = vector.load %arg3[%c0_3, %c0_4] : memref<128x384xbf16, #tpu.memory_space<vmem>>, vector<128x384xbf16>
    %cst = arith.constant dense<0.000000e+00> : vector<8x384xf32>
    %4 = tpu.matmul %0, %3, %cst {dimension_numbers = #tpu.dot_dimension_numbers<[1], [0], [0], [1], [0, 0, 1, 1], [], []>} : vector<8x128xbf16>, vector<128x384xbf16>, vector<8x384xf32> -> vector<8x384xf32>
    %c0_5 = arith.constant 0 : index
    %c0_6 = arith.constant 0 : index
    %5 = vector.load %arg5[%c0_5, %c0_6] : memref<1x384xf32, #tpu.memory_space<vmem>>, vector<1x384xf32>
    %6 = vector.broadcast %5 : vector<1x384xf32> to vector<8x384xf32>
    %7 = arith.addf %4, %6 : vector<8x384xf32>
    %c0_7 = arith.constant 0 : index
    %c0_8 = arith.constant 0 : index
    %8 = vector.load %arg4[%c0_7, %c0_8] : memref<128x384xbf16, #tpu.memory_space<vmem>>, vector<128x384xbf16>
    %cst_9 = arith.constant dense<0.000000e+00> : vector<8x384xf32>
    %9 = tpu.matmul %2, %8, %cst_9 {dimension_numbers = #tpu.dot_dimension_numbers<[1], [0], [0], [1], [0, 0, 1, 1], [], []>} : vector<8x128xbf16>, vector<128x384xbf16>, vector<8x384xf32> -> vector<8x384xf32>
    %c0_10 = arith.constant 0 : index
    %c0_11 = arith.constant 0 : index
    %10 = vector.load %arg6[%c0_10, %c0_11] : memref<1x384xf32, #tpu.memory_space<vmem>>, vector<1x384xf32>
    %11 = vector.broadcast %10 : vector<1x384xf32> to vector<8x384xf32>
    %12 = arith.addf %9, %11 : vector<8x384xf32>
    %13 = vector.extract_strided_slice %7 {offsets = [0, 0], sizes = [8, 128], strides = [1, 1]} : vector<8x384xf32> to vector<8x128xf32>
    %14 = vector.extract_strided_slice %7 {offsets = [0, 128], sizes = [8, 128], strides = [1, 1]} : vector<8x384xf32> to vector<8x128xf32>
    %15 = vector.extract_strided_slice %7 {offsets = [0, 256], sizes = [8, 128], strides = [1, 1]} : vector<8x384xf32> to vector<8x128xf32>
    %16 = vector.extract_strided_slice %12 {offsets = [0, 0], sizes = [8, 128], strides = [1, 1]} : vector<8x384xf32> to vector<8x128xf32>
    %17 = vector.extract_strided_slice %12 {offsets = [0, 128], sizes = [8, 128], strides = [1, 1]} : vector<8x384xf32> to vector<8x128xf32>
    %18 = vector.extract_strided_slice %12 {offsets = [0, 256], sizes = [8, 128], strides = [1, 1]} : vector<8x384xf32> to vector<8x128xf32>
    %19 = arith.addf %13, %16 : vector<8x128xf32>
    %20 = arith.negf %19 : vector<8x128xf32>
    %21 = math.exp %20 : vector<8x128xf32>
    %cst_12 = arith.constant 1.000000e+00 : f32
    %22 = vector.broadcast %cst_12 : f32 to vector<8x128xf32>
    %23 = arith.addf %22, %21 : vector<8x128xf32>
    %24 = arith.divf %22, %23 : vector<8x128xf32>
    %25 = arith.addf %14, %17 : vector<8x128xf32>
    %26 = arith.negf %25 : vector<8x128xf32>
    %27 = math.exp %26 : vector<8x128xf32>
    %cst_13 = arith.constant 1.000000e+00 : f32
    %28 = vector.broadcast %cst_13 : f32 to vector<8x128xf32>
    %29 = arith.addf %28, %27 : vector<8x128xf32>
    %30 = arith.divf %28, %29 : vector<8x128xf32>
    %31 = arith.mulf %24, %18 : vector<8x128xf32>
    %32 = arith.addf %15, %31 : vector<8x128xf32>
    %33 = math.tanh %32 : vector<8x128xf32>
    %cst_14 = arith.constant 1.000000e+00 : f32
    %34 = vector.broadcast %cst_14 : f32 to vector<8x128xf32>
    %35 = arith.subf %34, %30 : vector<8x128xf32>
    %36 = arith.mulf %35, %33 : vector<8x128xf32>
    %37 = arith.mulf %30, %1 : vector<8x128xf32>
    %38 = arith.addf %36, %37 : vector<8x128xf32>
    %c0_15 = arith.constant 0 : index
    %c0_16 = arith.constant 0 : index
    %c0_17 = arith.constant 0 : index
    %39 = vector.load %arg10[%c0_15, %c0_16, %c0_17] : memref<1x8x128xf32, #tpu.memory_space<vmem>>, vector<1x8x128xf32>
    %40 = vector.shape_cast %39 : vector<1x8x128xf32> to vector<8x128xf32>
    %41 = vector.shape_cast %38 : vector<8x128xf32> to vector<1x8x128xf32>
    tpu.vector_store %arg10[%c0_15, %c0_16, %c0_17], %41 {strides = array<i32>} : memref<1x8x128xf32, #tpu.memory_space<vmem>>, vector<1x8x128xf32>,
    %42 = arith.truncf %38 : vector<8x128xf32> to vector<8x128xbf16>
    %c0_18 = arith.constant 0 : index
    %c0_19 = arith.constant 0 : index
    %c0_20 = arith.constant 0 : index
    %43 = vector.load %arg7[%c0_18, %c0_19, %c0_20] : memref<1x128x512xbf16, #tpu.memory_space<vmem>>, vector<1x128x512xbf16>
    %44 = vector.shape_cast %43 : vector<1x128x512xbf16> to vector<128x512xbf16>
    %cst_21 = arith.constant dense<0.000000e+00> : vector<8x512xf32>
    %45 = tpu.matmul %42, %44, %cst_21 {dimension_numbers = #tpu.dot_dimension_numbers<[1], [0], [0], [1], [0, 0, 1, 1], [], []>} : vector<8x128xbf16>, vector<128x512xbf16>, vector<8x512xf32> -> vector<8x512xf32>
    %c0_22 = arith.constant 0 : index
    %c0_23 = arith.constant 0 : index
    %c0_24 = arith.constant 0 : index
    %46 = vector.load %arg8[%c0_22, %c0_23, %c0_24] : memref<1x1x512xf32, #tpu.memory_space<vmem>>, vector<1x1x512xf32>
    %47 = vector.shape_cast %46 : vector<1x1x512xf32> to vector<1x512xf32>
    %48 = vector.broadcast %47 : vector<1x512xf32> to vector<8x512xf32>
    %49 = arith.addf %45, %48 : vector<8x512xf32>
    %c0_25 = arith.constant 0 : index
    %c0_26 = arith.constant 0 : index
    %50 = vector.load %arg9[%c0_25, %c0_26] : memref<8x512xf32, #tpu.memory_space<vmem>>, vector<8x512xf32>
    tpu.vector_store %arg9[%c0_25, %c0_26], %49 {strides = array<i32>} : memref<8x512xf32, #tpu.memory_space<vmem>>, vector<8x512xf32>,
    return
  }
  func.func @transform_0(%arg0: i32) -> (i32, i32) {
    %c0_i32 = arith.constant 0 : i32
    %c0_i32_0 = arith.constant 0 : i32
    %c0_i32_1 = arith.constant 0 : i32
    return %c0_i32, %c0_i32_0 : i32, i32
  }
  func.func @transform_1(%arg0: i32) -> (i32, i32) {
    %c0_i32 = arith.constant 0 : i32
    %c0_i32_0 = arith.constant 0 : i32
    %c0_i32_1 = arith.constant 0 : i32
    return %c0_i32, %c0_i32_0 : i32, i32
  }
  func.func @transform_2(%arg0: i32) -> (i32, i32) {
    %c0_i32 = arith.constant 0 : i32
    %c0_i32_0 = arith.constant 0 : i32
    %c0_i32_1 = arith.constant 0 : i32
    return %c0_i32, %c0_i32_0 : i32, i32
  }
  func.func @transform_3(%arg0: i32) -> (i32, i32) {
    %c0_i32 = arith.constant 0 : i32
    %c0_i32_0 = arith.constant 0 : i32
    %c0_i32_1 = arith.constant 0 : i32
    return %c0_i32, %c0_i32_0 : i32, i32
  }
  func.func @transform_4(%arg0: i32) -> (i32, i32) {
    %c0_i32 = arith.constant 0 : i32
    %c0_i32_0 = arith.constant 0 : i32
    %c0_i32_1 = arith.constant 0 : i32
    return %c0_i32, %c0_i32_0 : i32, i32
  }
  func.func @transform_5(%arg0: i32) -> (i32, i32) {
    %c0_i32 = arith.constant 0 : i32
    %c0_i32_0 = arith.constant 0 : i32
    %c0_i32_1 = arith.constant 0 : i32
    return %c0_i32, %c0_i32_0 : i32, i32
  }
  func.func @transform_6(%arg0: i32) -> (i32, i32, i32) {
    %c0_i32 = arith.constant 0 : i32
    %c0_i32_0 = arith.constant 0 : i32
    %c0_i32_1 = arith.constant 0 : i32
    return %arg0, %c0_i32, %c0_i32_0 : i32, i32, i32
  }
  func.func @transform_7(%arg0: i32) -> (i32, i32, i32) {
    %c0_i32 = arith.constant 0 : i32
    %c0_i32_0 = arith.constant 0 : i32
    %c0_i32_1 = arith.constant 0 : i32
    return %arg0, %c0_i32, %c0_i32_0 : i32, i32, i32
  }
  func.func @transform_8(%arg0: i32) -> (i32, i32) {
    %c0_i32 = arith.constant 0 : i32
    %c0_i32_0 = arith.constant 0 : i32
    return %c0_i32, %arg0 : i32, i32
  }
  func.func @transform_9(%arg0: i32) -> (i32, i32, i32) {
    %c0_i32 = arith.constant 0 : i32
    %c0_i32_0 = arith.constant 0 : i32
    %c0_i32_1 = arith.constant 0 : i32
    return %arg0, %c0_i32, %c0_i32_0 : i32, i32, i32
  }
}

</mosaic_0001>

<llo_original>
// kernel: decoder_forward.1
$region0: #{decoder_forward.1}
  #allocation0 [shape = 'u32[]', space=smem, size = 0x4, offset = 0x4, fixed_abs, tag = 'smem constant byte address 0x4 - core index']
  #allocation1 [shape = 'u32[144,128]{1,0:T(1,128)}', space=vmem, size = 0x12000, scoped, tag = 'internal scratch']
  %s0 = inlined_call_operand.vmem [shape: bf16[8,128], index: 0, kind: input, shape index: {}]
  %s1 = inlined_call_operand.vmem [shape: f32[8,128], index: 1, kind: input, shape index: {}]
  %s2 = inlined_call_operand.hbm [shape: bf16[128,384], index: 2, kind: input, shape index: {}]
  %s3 = inlined_call_operand.hbm [shape: bf16[128,384], index: 3, kind: input, shape index: {}]
  %s4 = inlined_call_operand.vmem [shape: f32[1,384], index: 4, kind: input, shape index: {}]
  %s5 = inlined_call_operand.vmem [shape: f32[1,384], index: 5, kind: input, shape index: {}]
  %s6 = inlined_call_operand.hbm [shape: bf16[2,128,512], index: 6, kind: input, shape index: {}]
  %s7 = inlined_call_operand.vmem [shape: f32[2,1,512], index: 7, kind: input, shape index: {}]
  %s8 = inlined_call_operand.hbm [shape: f32[8,1024], index: 8, kind: output, shape index: {0}]
  %s9 = inlined_call_operand.vmem [shape: f32[2,8,128], index: 9, kind: output, shape index: {1}]
  %10 = xla_tuple %s8, %s9
  %s11 = sld [smem:[#allocation0]]
  $region85: #{decoder_forward.1} parent=0
    _
  %s13 = ssub.s32 1, %s11
  %s14 = scalar_select 0, %s13, %s11
  $region1: #{decoder_forward.1} parent=0
    #allocation2 [shape = 'u8[98304]{0}', space=vmem, size = 0x18000, scoped, tag = 'input window, operand 2, single buffered']
    #allocation3 [shape = 's32[2]{0}', space=sflag, size = 0x8, scoped, tag = 'scoped memory for decoder_forward.1']
    #allocation4 [shape = 's32[2]{0}', space=sflag, size = 0x8, scoped, tag = 'scoped memory for decoder_forward.1']
    #allocation5 [shape = 'u8[98304]{0}', space=vmem, size = 0x18000, scoped, tag = 'input window, operand 3, single buffered']
    #allocation6 [shape = 's32[1]{0}', space=sflag, size = 0x4, scoped, tag = 'scoped memory for decoder_forward.1']
    #allocation7 [shape = 'u8[262144]{0}', space=vmem, size = 0x40000, scoped, tag = 'input window, operand 6']
    #allocation8 [shape = 'u8[32768]{0}', space=vmem, size = 0x8000, scoped, tag = 'output window, operand 0']
    %15 = vsyncpa [#allocation3], 0
    %16 = vsyncpa [#allocation6], 0
    %17 = vsyncpa [#allocation4], 0
    %s18 = scalar_lea.sflag [#allocation4], 1
    %19 = vsyncpa %s18, 0
    loop: start=0, step=1, limit=4
    $region2: #{decoder_forward.1} parent=1 // loop_pre_header
      _
    $region3: #{decoder_forward.1} parent=1 // loop_header
      %s21 = sphi 0, %s25
      %p22 = scmp.ge.s32.totalorder %s21, 4
      %s29 = sphi 0, %s29
      %s31 = sphi 0, %s29
      %s32 = sphi 0, %s31
      %s46 = sphi 0, %s32
      %s50 = sphi 0, %s50
      %s52 = sphi 0, %s50
      %s53 = sphi 0, %s52
      %s67 = sphi 0, %s53
      %s71 = sphi 0, %s71
      %s73 = sphi 0, %s71
      %s74 = sphi 0, %s73
      %s88 = sphi 0, %s74
      %s92 = sphi 0, %s92
      %s94 = sphi 0, %s92
      %s95 = sphi 0, %s94
      %s109 = sphi 0, %s95
      %s113 = sphi 0, %s113
      %s115 = sphi 0, %s113
      %s116 = sphi 0, %s115
      %s130 = sphi 0, %s116
      %s134 = sphi 0, %s134
      %s136 = sphi 0, %s134
      %s137 = sphi 0, %s136
      %s151 = sphi 0, %s137
      %s157 = sphi 0, %s159
      %s160 = sphi 0, %s157
      %s161 = sphi 0, %s160
      %s177 = sphi 0, %s161
      %s183 = sphi 0, %s185
      %s186 = sphi 0, %s183
      %s187 = sphi 0, %s186
      %s203 = sphi 0, %s187
      %s209 = sphi 0, %s211
      %s212 = sphi 0, %s209
      %s213 = sphi 0, %s212
      %s229 = sphi 0, %s213
      %s235 = sphi 0, %s237
      %s238 = sphi 0, %s235
      %s239 = sphi 0, %s238
      %s255 = sphi 0, %s239
    $region4: #{decoder_forward.1} parent=1 // loop_header_branch
      %24 = sbr.rel (%p22) target = $region8
    $region5: #{decoder_forward.1} parent=1 // loop_body
      %s26 = ssub.s32 %s21, 1
      %s27 = ssub.s32 %s21, 2
      %s28 = sadd.s32 %s21, 1
      %s30 = sadd.s32 %s29, 1
      %p33 = scmp.eq.s32.totalorder %s21, 1
      %p34 = scmp.ne.s32.totalorder %s29, %s31
      %p35 = scmp.eq.s32.totalorder %s21, 0
      %p36 = por %p34, %p35
      %p37 = scmp.ne.s32.totalorder %s29, %s31
      %p38 = scmp.eq.s32.totalorder %s26, 1
      %p39 = por %p37, %p38
      %p40 = scmp.ne.s32.totalorder %s31, %s32
      %p41 = scmp.eq.s32.totalorder %s26, 0
      %p42 = por %p40, %p41
      %p43 = scmp.ne.s32.totalorder %s31, %s32
      %p44 = scmp.eq.s32.totalorder %s27, 1
      %p45 = por %p43, %p44
      %p47 = scmp.ne.s32.totalorder %s32, %s46
      %p48 = scmp.eq.s32.totalorder %s27, 0
      %p49 = por %p47, %p48
      %s51 = sadd.s32 %s50, 1
      %p54 = scmp.eq.s32.totalorder %s21, 1
      %p55 = scmp.ne.s32.totalorder %s50, %s52
      %p56 = scmp.eq.s32.totalorder %s21, 0
      %p57 = por %p55, %p56
      %p58 = scmp.ne.s32.totalorder %s50, %s52
      %p59 = scmp.eq.s32.totalorder %s26, 1
      %p60 = por %p58, %p59
      %p61 = scmp.ne.s32.totalorder %s52, %s53
      %p62 = scmp.eq.s32.totalorder %s26, 0
      %p63 = por %p61, %p62
      %p64 = scmp.ne.s32.totalorder %s52, %s53
      %p65 = scmp.eq.s32.totalorder %s27, 1
      %p66 = por %p64, %p65
      %p68 = scmp.ne.s32.totalorder %s53, %s67
      %p69 = scmp.eq.s32.totalorder %s27, 0
      %p70 = por %p68, %p69
      %s72 = sadd.s32 %s71, 1
      %p75 = scmp.eq.s32.totalorder %s21, 1
      %p76 = scmp.ne.s32.totalorder %s71, %s73
      %p77 = scmp.eq.s32.totalorder %s21, 0
      %p78 = por %p76, %p77
      %p79 = scmp.ne.s32.totalorder %s71, %s73
      %p80 = scmp.eq.s32.totalorder %s26, 1
      %p81 = por %p79, %p80
      %p82 = scmp.ne.s32.totalorder %s73, %s74
      %p83 = scmp.eq.s32.totalorder %s26, 0
      %p84 = por %p82, %p83
      %p85 = scmp.ne.s32.totalorder %s73, %s74
      %p86 = scmp.eq.s32.totalorder %s27, 1
      %p87 = por %p85, %p86
      %p89 = scmp.ne.s32.totalorder %s74, %s88
      %p90 = scmp.eq.s32.totalorder %s27, 0
      %p91 = por %p89, %p90
      %s93 = sadd.s32 %s92, 1
      %p96 = scmp.eq.s32.totalorder %s21, 1
      %p97 = scmp.ne.s32.totalorder %s92, %s94
      %p98 = scmp.eq.s32.totalorder %s21, 0
      %p99 = por %p97, %p98
      %p100 = scmp.ne.s32.totalorder %s92, %s94
      %p101 = scmp.eq.s32.totalorder %s26, 1
      %p102 = por %p100, %p101
      %p103 = scmp.ne.s32.totalorder %s94, %s95
      %p104 = scmp.eq.s32.totalorder %s26, 0
      %p105 = por %p103, %p104
      %p106 = scmp.ne.s32.totalorder %s94, %s95
      %p107 = scmp.eq.s32.totalorder %s27, 1
      %p108 = por %p106, %p107
      %p110 = scmp.ne.s32.totalorder %s95, %s109
      %p111 = scmp.eq.s32.totalorder %s27, 0
      %p112 = por %p110, %p111
      %s114 = sadd.s32 %s113, 1
      %p117 = scmp.eq.s32.totalorder %s21, 1
      %p118 = scmp.ne.s32.totalorder %s113, %s115
      %p119 = scmp.eq.s32.totalorder %s21, 0
      %p120 = por %p118, %p119
      %p121 = scmp.ne.s32.totalorder %s113, %s115
      %p122 = scmp.eq.s32.totalorder %s26, 1
      %p123 = por %p121, %p122
      %p124 = scmp.ne.s32.totalorder %s115, %s116
      %p125 = scmp.eq.s32.totalorder %s26, 0
      %p126 = por %p124, %p125
      %p127 = scmp.ne.s32.totalorder %s115, %s116
      %p128 = scmp.eq.s32.totalorder %s27, 1
      %p129 = por %p127, %p128
      %p131 = scmp.ne.s32.totalorder %s116, %s130
      %p132 = scmp.eq.s32.totalorder %s27, 0
      %p133 = por %p131, %p132
      %s135 = sadd.s32 %s134, 1
      %p138 = scmp.eq.s32.totalorder %s21, 1
      %p139 = scmp.ne.s32.totalorder %s134, %s136
      %p140 = scmp.eq.s32.totalorder %s21, 0
      %p141 = por %p139, %p140
      %p142 = scmp.ne.s32.totalorder %s134, %s136
      %p143 = scmp.eq.s32.totalorder %s26, 1
      %p144 = por %p142, %p143
      %p145 = scmp.ne.s32.totalorder %s136, %s137
      %p146 = scmp.eq.s32.totalorder %s26, 0
      %p147 = por %p145, %p146
      %p148 = scmp.ne.s32.totalorder %s136, %s137
      %p149 = scmp.eq.s32.totalorder %s27, 1
      %p150 = por %p148, %p149
      %p152 = scmp.ne.s32.totalorder %s137, %s151
      %p153 = scmp.eq.s32.totalorder %s27, 0
      %p154 = por %p152, %p153
      %s155 = ssub.s32 %s21, %s28
      %p156 = scmp.eq.s32.totalorder %s155, 0
      %s158 = sadd.s32 %s157, 1
      %s159 = scalar_select %p156, %s157, %s158
      %p162 = pneg %p156
      %p163 = scmp.eq.s32.totalorder %s21, 1
      %p164 = por %p162, %p163
      %p165 = scmp.ne.s32.totalorder %s157, %s160
      %p166 = scmp.eq.s32.totalorder %s21, 0
      %p167 = por %p165, %p166
      %p168 = scmp.ne.s32.totalorder %s157, %s160
      %p169 = scmp.eq.s32.totalorder %s26, 1
      %p170 = por %p168, %p169
      %p171 = scmp.ne.s32.totalorder %s160, %s161
      %p172 = scmp.eq.s32.totalorder %s26, 0
      %p173 = por %p171, %p172
      %p174 = scmp.ne.s32.totalorder %s160, %s161
      %p175 = scmp.eq.s32.totalorder %s27, 1
      %p176 = por %p174, %p175
      %p178 = scmp.ne.s32.totalorder %s161, %s177
      %p179 = scmp.eq.s32.totalorder %s27, 0
      %p180 = por %p178, %p179
      %s181 = ssub.s32 %s21, %s28
      %p182 = scmp.eq.s32.totalorder %s181, 0
      %s184 = sadd.s32 %s183, 1
      %s185 = scalar_select %p182, %s183, %s184
      %p188 = pneg %p182
      %p189 = scmp.eq.s32.totalorder %s21, 1
      %p190 = por %p188, %p189
      %p191 = scmp.ne.s32.totalorder %s183, %s186
      %p192 = scmp.eq.s32.totalorder %s21, 0
      %p193 = por %p191, %p192
      %p194 = scmp.ne.s32.totalorder %s183, %s186
      %p195 = scmp.eq.s32.totalorder %s26, 1
      %p196 = por %p194, %p195
      %p197 = scmp.ne.s32.totalorder %s186, %s187
      %p198 = scmp.eq.s32.totalorder %s26, 0
      %p199 = por %p197, %p198
      %p200 = scmp.ne.s32.totalorder %s186, %s187
      %p201 = scmp.eq.s32.totalorder %s27, 1
      %p202 = por %p200, %p201
      %p204 = scmp.ne.s32.totalorder %s187, %s203
      %p205 = scmp.eq.s32.totalorder %s27, 0
      %p206 = por %p204, %p205
      %s207 = ssub.s32 %s21, %s28
      %p208 = scmp.eq.s32.totalorder %s207, 0
      %s210 = sadd.s32 %s209, 1
      %s211 = scalar_select %p208, %s209, %s210
      %p214 = pneg %p208
      %p215 = scmp.eq.s32.totalorder %s21, 1
      %p216 = por %p214, %p215
      %p217 = scmp.ne.s32.totalorder %s209, %s212
      %p218 = scmp.eq.s32.totalorder %s21, 0
      %p219 = por %p217, %p218
      %p220 = scmp.ne.s32.totalorder %s209, %s212
      %p221 = scmp.eq.s32.totalorder %s26, 1
      %p222 = por %p220, %p221
      %p223 = scmp.ne.s32.totalorder %s212, %s213
      %p224 = scmp.eq.s32.totalorder %s26, 0
      %p225 = por %p223, %p224
      %p226 = scmp.ne.s32.totalorder %s212, %s213
      %p227 = scmp.eq.s32.totalorder %s27, 1
      %p228 = por %p226, %p227
      %p230 = scmp.ne.s32.totalorder %s213, %s229
      %p231 = scmp.eq.s32.totalorder %s27, 0
      %p232 = por %p230, %p231
      %s233 = ssub.s32 %s21, %s28
      %p234 = scmp.eq.s32.totalorder %s233, 0
      %s236 = sadd.s32 %s235, 1
      %s237 = scalar_select %p234, %s235, %s236
      %p240 = pneg %p234
      %p241 = scmp.eq.s32.totalorder %s21, 1
      %p242 = por %p240, %p241
      %p243 = scmp.ne.s32.totalorder %s235, %s238
      %p244 = scmp.eq.s32.totalorder %s21, 0
      %p245 = por %p243, %p244
      %p246 = scmp.ne.s32.totalorder %s235, %s238
      %p247 = scmp.eq.s32.totalorder %s26, 1
      %p248 = por %p246, %p247
      %p249 = scmp.ne.s32.totalorder %s238, %s239
      %p250 = scmp.eq.s32.totalorder %s26, 0
      %p251 = por %p249, %p250
      %p252 = scmp.ne.s32.totalorder %s238, %s239
      %p253 = scmp.eq.s32.totalorder %s27, 1
      %p254 = por %p252, %p253
      %p256 = scmp.ne.s32.totalorder %s239, %s255
      %p257 = scmp.eq.s32.totalorder %s27, 0
      %p258 = por %p256, %p257
      %p259 = scmp.le.s32.totalorder 1, %s21
      %p260 = scmp.lt.s32.totalorder %s21, 3
      %p261 = pnand %p259, %p260
      %p262 = pneg %p261
      // Predicated region
      $region9: #{decoder_forward.1} parent=5 // pred_check
        _
      $region10: #{decoder_forward.1} parent=5 // pred_check_branch
        %264 = sbr.rel (%p261) target = $region12
      $region11: #{decoder_forward.1} parent=5 // pred_region
        %s265 = ssub.s32 %s21, 1
        // Predicated region
        $region13: #{decoder_forward.1} parent=11 // pred_check
          %p266 = pneg %p42
        $region14: #{decoder_forward.1} parent=11 // pred_check_branch
          %268 = sbr.rel (%p266) target = $region16
        $region15: #{decoder_forward.1} parent=11 // pred_region
          _
        $region16: #{decoder_forward.1} parent=11 // pred_fallthru
          _
        // Predicated region
        $region17: #{decoder_forward.1} parent=11 // pred_check
          %p269 = pneg %p63
        $region18: #{decoder_forward.1} parent=11 // pred_check_branch
          %271 = sbr.rel (%p269) target = $region20
        $region19: #{decoder_forward.1} parent=11 // pred_region
          _
        $region20: #{decoder_forward.1} parent=11 // pred_fallthru
          _
        // Predicated region
        $region21: #{decoder_forward.1} parent=11 // pred_check
          %p272 = pneg %p84
        $region22: #{decoder_forward.1} parent=11 // pred_check_branch
          %274 = sbr.rel (%p272) target = $region24
        $region23: #{decoder_forward.1} parent=11 // pred_region
          %s276 = ssub.s32 3072, 3072
          %277 = vsyncadd [#allocation3], %s276
          %s278 = sshll.u32 [#allocation2], 4
          %s279 = int_to_ptr.vmem [resolvable:$true] %s278
          %284 = dma.hbm_to_vmem [thread:$0]  %s2, 3072, %s279, [#allocation3], 192, 192, 12
        $region24: #{decoder_forward.1} parent=11 // pred_fallthru
          _
        // Predicated region
        $region25: #{decoder_forward.1} parent=11 // pred_check
          %p285 = pneg %p105
        $region26: #{decoder_forward.1} parent=11 // pred_check_branch
          %287 = sbr.rel (%p285) target = $region28
        $region27: #{decoder_forward.1} parent=11 // pred_region
          %s289 = ssub.s32 3072, 3072
          %290 = vsyncadd [#allocation6], %s289
          %s291 = sshll.u32 [#allocation5], 4
          %s292 = int_to_ptr.vmem [resolvable:$true] %s291
          %297 = dma.hbm_to_vmem [thread:$0]  %s3, 3072, %s292, [#allocation6], 192, 192, 12
        $region28: #{decoder_forward.1} parent=11 // pred_fallthru
          _
        // Predicated region
        $region29: #{decoder_forward.1} parent=11 // pred_check
          %p298 = pneg %p126
        $region30: #{decoder_forward.1} parent=11 // pred_check_branch
          %300 = sbr.rel (%p298) target = $region32
        $region31: #{decoder_forward.1} parent=11 // pred_region
          _
        $region32: #{decoder_forward.1} parent=11 // pred_fallthru
          _
        // Predicated region
        $region33: #{decoder_forward.1} parent=11 // pred_check
          %p301 = pneg %p147
        $region34: #{decoder_forward.1} parent=11 // pred_check_branch
          %303 = sbr.rel (%p301) target = $region36
        $region35: #{decoder_forward.1} parent=11 // pred_region
          _
        $region36: #{decoder_forward.1} parent=11 // pred_fallthru
          _
      $region12: #{decoder_forward.1} parent=5 // pred_fallthru
        _
      %p304 = scmp.lt.s32.totalorder %s21, 2
      // Predicated region
      $region37: #{decoder_forward.1} parent=5 // pred_check
        %p305 = pneg %p304
      $region38: #{decoder_forward.1} parent=5 // pred_check_branch
        %307 = sbr.rel (%p305) target = $region40
      $region39: #{decoder_forward.1} parent=5 // pred_region
        // Predicated region
        $region41: #{decoder_forward.1} parent=39 // pred_check
          %p308 = pneg %p167
        $region42: #{decoder_forward.1} parent=39 // pred_check_branch
          %310 = sbr.rel (%p308) target = $region44
        $region43: #{decoder_forward.1} parent=39 // pred_region
          %s311 = sand.u32 %s21, 1
          %s312 = scalar_lea.sflag [#allocation3], %s311
          %s313 = sand.u32 %s157, 1
          %s314 = smul.addr %s313, 256
          %s315 = scalar_lea.vmem [#allocation7], %s314
          %s317 = ssub.s32 4096, 4096
          %318 = vsyncadd %s312, %s317
          %s319 = smul.addr %s21, 64
          %s320 = smul.addr %s319, 64
          %s321 = scalar_lea.hbm %s6, %s320
          %s322 = sshll.u32 %s315, 4
          %s323 = int_to_ptr.vmem [resolvable:$true] %s322
          %328 = dma.hbm_to_vmem [thread:$0]  %s321, 4096, %s323, %s312, 256, 256, 16
        $region44: #{decoder_forward.1} parent=39 // pred_fallthru
          _
        // Predicated region
        $region45: #{decoder_forward.1} parent=39 // pred_check
          %p329 = pneg %p193
        $region46: #{decoder_forward.1} parent=39 // pred_check_branch
          %331 = sbr.rel (%p329) target = $region48
        $region47: #{decoder_forward.1} parent=39 // pred_region
          %p332 = scmp.lt.s32.totalorder %s21, 1
          %s333 = scalar_select %p332, %s21, 1
          %s334 = smul.addr %s333, 4
          %s335 = scalar_lea.vmem %s7, %s334
        $region48: #{decoder_forward.1} parent=39 // pred_fallthru
          _
      $region40: #{decoder_forward.1} parent=5 // pred_fallthru
        _
      %p336 = scmp.le.s32.totalorder 1, %s21
      %p337 = scmp.lt.s32.totalorder %s21, 3
      %p338 = pnand %p336, %p337
      %p339 = pneg %p338
      // Predicated region
      $region49: #{decoder_forward.1} parent=5 // pred_check
        _
      $region50: #{decoder_forward.1} parent=5 // pred_check_branch
        %341 = sbr.rel (%p338) target = $region52
      $region51: #{decoder_forward.1} parent=5 // pred_region
        %s342 = ssub.s32 %s21, 1
        // Predicated region
        $region53: #{decoder_forward.1} parent=51 // pred_check
          %p343 = pneg %p84
        $region54: #{decoder_forward.1} parent=51 // pred_check_branch
          %345 = sbr.rel (%p343) target = $region56
        $region55: #{decoder_forward.1} parent=51 // pred_region
          %346 = dma.done [#allocation3], 3072
        $region56: #{decoder_forward.1} parent=51 // pred_fallthru
          _
        // Predicated region
        $region57: #{decoder_forward.1} parent=51 // pred_check
          %p347 = pneg %p105
        $region58: #{decoder_forward.1} parent=51 // pred_check_branch
          %349 = sbr.rel (%p347) target = $region60
        $region59: #{decoder_forward.1} parent=51 // pred_region
          %350 = dma.done [#allocation6], 3072
        $region60: #{decoder_forward.1} parent=51 // pred_fallthru
          _
        %s351 = sand.u32 %s26, 1
        %s352 = scalar_lea.sflag [#allocation3], %s351
        %s353 = sand.u32 %s160, 1
        %s354 = smul.addr %s353, 256
        %s355 = scalar_lea.vmem [#allocation7], %s354
        // Predicated region
        $region61: #{decoder_forward.1} parent=51 // pred_check
          %p356 = pneg %p173
        $region62: #{decoder_forward.1} parent=51 // pred_check_branch
          %358 = sbr.rel (%p356) target = $region64
        $region63: #{decoder_forward.1} parent=51 // pred_region
          %359 = dma.done %s352, 4096
        $region64: #{decoder_forward.1} parent=51 // pred_fallthru
          _
        %p360 = pneg %p42
        %p361 = pneg %p39
        %p362 = pneg %p63
        %p363 = pneg %p60
        %p364 = pneg %p84
        %p365 = pneg %p81
        %p366 = pneg %p105
        %p367 = pneg %p102
        %p368 = pneg %p126
        %p369 = pneg %p123
        %p370 = pneg %p147
        %p371 = pneg %p144
        %s372 = sand.u32 %s26, 1
        %s373 = scalar_lea.sflag [#allocation3], %s372
        %s374 = sand.u32 %s160, 1
        %s375 = smul.addr %s374, 256
        %s376 = scalar_lea.vmem [#allocation7], %s375
        %p377 = pneg %p173
        %p378 = pneg %p170
        %p379 = scmp.lt.s32.totalorder %s26, 1
        %s380 = scalar_select %p379, %s26, 1
        %s381 = smul.addr %s380, 4
        %s382 = scalar_lea.vmem %s7, %s381
        %p383 = pneg %p199
        %p384 = pneg %p196
        %p385 = pneg %p225
        %p386 = pneg %p222
        %s387 = sand.u32 %s212, 1
        %s388 = scalar_lea.sflag [#allocation4], %s387
        %s389 = sand.u32 %s212, 1
        %s390 = smul.addr %s389, 32
        %s391 = scalar_lea.vmem [#allocation8], %s390
        %p392 = pneg %p251
        %p393 = pneg %p248
        %p394 = scmp.lt.s32.totalorder %s26, 1
        %s395 = scalar_select %p394, %s26, 1
        %s396 = smul.addr %s395, 8
        %s397 = scalar_lea.vmem %s9, %s396
        %p398 = scmp.lt.s32.totalorder %s26, 1
        %s399 = scalar_select %p398, %s26, 1
        %s400 = smul.addr %s399, 4
        %s401 = scalar_lea.vmem %s7, %s400
        %s402 = smul.u32 4, %s26
        %p403 = scmp.lt.s32.totalorder %s26, 1
        %s404 = scalar_select %p403, %s26, 1
        %s405 = smul.addr %s404, 8
        %s406 = scalar_lea.vmem %s9, %s405
        %v408 = vld [vmem:[%s0] sm:$0xf]
        %v409 = vld [vmem:[%s1] sm:$0xff]
        %v410 = vpack.c.bf16 %v409, %v409
        %v411 = vld [vmem:[#allocation2] sm:$0xff]
        %v412 = vld [vmem:[#allocation2 + $0x8] sm:$0xf]
        %v413 = vld [vmem:[#allocation2 + $0xc] sm:$0xff]
        %v414 = vld [vmem:[#allocation2 + $0x14] sm:$0xf]
        %v415 = vld [vmem:[#allocation2 + $0x18] sm:$0xff]
        %v416 = vld [vmem:[#allocation2 + $0x20] sm:$0xf]
        %v417 = vld [vmem:[#allocation2 + $0x24] sm:$0xff]
        %v418 = vld [vmem:[#allocation2 + $0x2c] sm:$0xf]
        %v419 = vld [vmem:[#allocation2 + $0x30] sm:$0xff]
        %v420 = vld [vmem:[#allocation2 + $0x38] sm:$0xf]
        %v421 = vld [vmem:[#allocation2 + $0x3c] sm:$0xff]
        %v422 = vld [vmem:[#allocation2 + $0x44] sm:$0xf]
        %v423 = vld [vmem:[#allocation2 + $0x48] sm:$0xff]
        %v424 = vld [vmem:[#allocation2 + $0x50] sm:$0xf]
        %v425 = vld [vmem:[#allocation2 + $0x54] sm:$0xff]
        %v426 = vld [vmem:[#allocation2 + $0x5c] sm:$0xf]
        %v427 = vld [vmem:[#allocation2 + $0x60] sm:$0xff]
        %v428 = vld [vmem:[#allocation2 + $0x68] sm:$0xf]
        %v429 = vld [vmem:[#allocation2 + $0x6c] sm:$0xff]
        %v430 = vld [vmem:[#allocation2 + $0x74] sm:$0xf]
        %v431 = vld [vmem:[#allocation2 + $0x78] sm:$0xff]
        %v432 = vld [vmem:[#allocation2 + $0x80] sm:$0xf]
        %v433 = vld [vmem:[#allocation2 + $0x84] sm:$0xff]
        %v434 = vld [vmem:[#allocation2 + $0x8c] sm:$0xf]
        %v435 = vld [vmem:[#allocation2 + $0x90] sm:$0xff]
        %v436 = vld [vmem:[#allocation2 + $0x98] sm:$0xf]
        %v437 = vld [vmem:[#allocation2 + $0x9c] sm:$0xff]
        %v438 = vld [vmem:[#allocation2 + $0xa4] sm:$0xf]
        %v439 = vld [vmem:[#allocation2 + $0xa8] sm:$0xff]
        %v440 = vld [vmem:[#allocation2 + $0xb0] sm:$0xf]
        %v441 = vld [vmem:[#allocation2 + $0xb4] sm:$0xff]
        %v442 = vld [vmem:[#allocation2 + $0xbc] sm:$0xf]
        %v443 = vld [vmem:[%s4] sm:$0x7]
        %v445 = vlaneseq
        %v446 = vshrl.u32 %v445, 7
        %v447 = vsub.s32 0, %v446
        %v448 = vrot.slane %v443, %v447
        %v449 = vlaneseq
        %v450 = vshrl.u32 %v449, 7
        %v451 = vsub.s32 1, %v450
        %v452 = vrot.slane %v443, %v451
        %v453 = vlaneseq
        %v454 = vshrl.u32 %v453, 7
        %v455 = vsub.s32 2, %v454
        %v456 = vrot.slane %v443, %v455
        %v492 = vunpack.c.l.b16 %v411
        %v493 = vunpack.c.h.b16 %v411
        %v494 = vunpack.c.l.b16 %v412
        %v495 = vunpack.c.l.b16 %v413
        %v496 = vunpack.c.h.b16 %v413
        %v497 = vunpack.c.l.b16 %v414
        %v498 = vunpack.c.l.b16 %v415
        %v499 = vunpack.c.h.b16 %v415
        %v500 = vunpack.c.l.b16 %v416
        %v501 = vunpack.c.l.b16 %v417
        %v502 = vunpack.c.h.b16 %v417
        %v503 = vunpack.c.l.b16 %v418
        %v504 = vunpack.c.l.b16 %v419
        %v505 = vunpack.c.h.b16 %v419
        %v506 = vunpack.c.l.b16 %v420
        %v507 = vunpack.c.l.b16 %v421
        %v508 = vunpack.c.h.b16 %v421
        %v509 = vunpack.c.l.b16 %v422
        %v510 = vunpack.c.l.b16 %v423
        %v511 = vunpack.c.h.b16 %v423
        %v512 = vunpack.c.l.b16 %v424
        %v513 = vunpack.c.l.b16 %v425
        %v514 = vunpack.c.h.b16 %v425
        %v515 = vunpack.c.l.b16 %v426
        %v516 = vunpack.c.l.b16 %v427
        %v517 = vunpack.c.h.b16 %v427
        %v518 = vunpack.c.l.b16 %v428
        %v519 = vunpack.c.l.b16 %v429
        %v520 = vunpack.c.h.b16 %v429
        %v521 = vunpack.c.l.b16 %v430
        %v522 = vunpack.c.l.b16 %v431
        %v523 = vunpack.c.h.b16 %v431
        %v524 = vunpack.c.l.b16 %v432
        %v525 = vunpack.c.l.b16 %v433
        %v526 = vunpack.c.h.b16 %v433
        %v527 = vunpack.c.l.b16 %v434
        %v528 = vunpack.c.l.b16 %v435
        %v529 = vunpack.c.h.b16 %v435
        %v530 = vunpack.c.l.b16 %v436
        %v531 = vunpack.c.l.b16 %v437
        %v532 = vunpack.c.h.b16 %v437
        %v533 = vunpack.c.l.b16 %v438
        %v534 = vunpack.c.l.b16 %v439
        %v535 = vunpack.c.h.b16 %v439
        %v536 = vunpack.c.l.b16 %v440
        %v537 = vunpack.c.l.b16 %v441
        %v538 = vunpack.c.h.b16 %v441
        %v539 = vunpack.c.l.b16 %v442
        %v540 = vpack.c.b16 %v495, %v492
        %v541 = vpack.c.b16 %v496, %v493
        %v542 = vpack.c.b16 %v497, %v494
        %v543 = vpack.c.b16 %v501, %v498
        %v544 = vpack.c.b16 %v502, %v499
        %v545 = vpack.c.b16 %v503, %v500
        %v546 = vpack.c.b16 %v507, %v504
        %v547 = vpack.c.b16 %v508, %v505
        %v548 = vpack.c.b16 %v509, %v506
        %v549 = vpack.c.b16 %v513, %v510
        %v550 = vpack.c.b16 %v514, %v511
        %v551 = vpack.c.b16 %v515, %v512
        %v552 = vpack.c.b16 %v519, %v516
        %v553 = vpack.c.b16 %v520, %v517
        %v554 = vpack.c.b16 %v521, %v518
        %v555 = vpack.c.b16 %v525, %v522
        %v556 = vpack.c.b16 %v526, %v523
        %v557 = vpack.c.b16 %v527, %v524
        %v558 = vpack.c.b16 %v531, %v528
        %v559 = vpack.c.b16 %v532, %v529
        %v560 = vpack.c.b16 %v533, %v530
        %v561 = vpack.c.b16 %v537, %v534
        %v562 = vpack.c.b16 %v538, %v535
        %v563 = vpack.c.b16 %v539, %v536
        %588 = vmatprep.subr.bf16.mxu0 %v562
        %589 = vmatpush1.bf16.msra.mxu0 %v561
        %590 = vmatprep.subr.bf16.mxu0 %v559
        %591 = vmatpush1.bf16.msra.mxu0 %v558
        %592 = vmatprep.subr.bf16.mxu0 %v556
        %593 = vmatpush1.bf16.msra.mxu0 %v555
        %594 = vmatprep.subr.bf16.mxu0 %v553
        %595 = vmatpush1.bf16.msra.mxu0 %v552
        %596 = vmatprep.subr.bf16.mxu0 %v550
        %597 = vmatpush1.bf16.msra.mxu0 %v549
        %598 = vmatprep.subr.bf16.mxu0 %v547
        %599 = vmatpush1.bf16.msra.mxu0 %v546
        %600 = vmatprep.subr.bf16.mxu0 %v544
        %601 = vmatpush1.bf16.msra.mxu0 %v543
        %602 = vmatprep.subr.bf16.mxu0 %v541
        %603 = vmatpush1.bf16.msra.mxu0 %v540
        %604 = vmatprep.subr.bf16.mxu0 0
        %605 = vmatpush2.bf16.msra.mxu0 0
        %606 = vmatprep.subr.bf16.mxu0 0
        %607 = vmatpush2.bf16.msra.mxu0 0
        %608 = vmatprep.subr.bf16.mxu0 0
        %609 = vmatpush2.bf16.msra.mxu0 0
        %610 = vmatprep.subr.bf16.mxu0 0
        %611 = vmatpush2.bf16.msra.mxu0 0
        %612 = vmatprep.subr.bf16.mxu0 0
        %613 = vmatpush2.bf16.msra.mxu0 0
        %614 = vmatprep.subr.bf16.mxu0 0
        %615 = vmatpush2.bf16.msra.mxu0 0
        %616 = vmatprep.subr.bf16.mxu0 0
        %617 = vmatpush2.bf16.msra.mxu0 0
        %618 = vmatprep.subr.bf16.mxu0 0
        %619 = vmatpush2.bf16.msra.mxu0 0
        %620 = vmatprep.mubr.bf16.mxu0 0
        %621 = vmatmul.mubr.bf16.gmra.mxu0 %v408
        %v622 = vpop.f32.mrf.mxu0
        %v623 = vadd.f32 %v448, %v622
        %v624 = vpop.f32.mrf.mxu0
        %v625 = vadd.f32 %v452, %v624
        %v626 = vpop.f32.mrf.mxu0
        %v627 = vpop.f32.mrf.mxu0
        %628 = vdwg.mxu0
        %629 = vmatprep.subr.bf16.mxu0 0
        %630 = vmatpush1.bf16.msra.mxu0 %v563
        %631 = vmatprep.subr.bf16.mxu0 0
        %632 = vmatpush1.bf16.msra.mxu0 %v560
        %633 = vmatprep.subr.bf16.mxu0 0
        %634 = vmatpush1.bf16.msra.mxu0 %v557
        %635 = vmatprep.subr.bf16.mxu0 0
        %636 = vmatpush1.bf16.msra.mxu0 %v554
        %637 = vmatprep.subr.bf16.mxu0 0
        %638 = vmatpush1.bf16.msra.mxu0 %v551
        %639 = vmatprep.subr.bf16.mxu0 0
        %640 = vmatpush1.bf16.msra.mxu0 %v548
        %641 = vmatprep.subr.bf16.mxu0 0
        %642 = vmatpush1.bf16.msra.mxu0 %v545
        %643 = vmatprep.subr.bf16.mxu0 0
        %644 = vmatpush1.bf16.msra.mxu0 %v542
        %645 = vmatprep.subr.bf16.mxu0 0
        %646 = vmatpush2.bf16.msra.mxu0 0
        %647 = vmatprep.subr.bf16.mxu0 0
        %648 = vmatpush2.bf16.msra.mxu0 0
        %649 = vmatprep.subr.bf16.mxu0 0
        %650 = vmatpush2.bf16.msra.mxu0 0
        %651 = vmatprep.subr.bf16.mxu0 0
        %652 = vmatpush2.bf16.msra.mxu0 0
        %653 = vmatprep.subr.bf16.mxu0 0
        %654 = vmatpush2.bf16.msra.mxu0 0
        %655 = vmatprep.subr.bf16.mxu0 0
        %656 = vmatpush2.bf16.msra.mxu0 0
        %657 = vmatprep.subr.bf16.mxu0 0
        %658 = vmatpush2.bf16.msra.mxu0 0
        %659 = vmatprep.subr.bf16.mxu0 0
        %660 = vmatpush2.bf16.msra.mxu0 0
        %661 = vmatprep.mubr.bf16.mxu0 0
        %662 = vmatmul.mubr.bf16.gmra.mxu0 %v408
        %v663 = vpop.f32.mrf.mxu0
        %v664 = vadd.f32 %v456, %v663
        %v665 = vpop.f32.mrf.mxu0
        %v666 = vpop.f32.mrf.mxu0
        %v667 = vpop.f32.mrf.mxu0
        %668 = vdwg.mxu0
        %v669 = vld [vmem:[#allocation5] sm:$0xff]
        %v670 = vld [vmem:[#allocation5 + $0x8] sm:$0xf]
        %v671 = vld [vmem:[#allocation5 + $0xc] sm:$0xff]
        %v672 = vld [vmem:[#allocation5 + $0x14] sm:$0xf]
        %v673 = vld [vmem:[#allocation5 + $0x18] sm:$0xff]
        %v674 = vld [vmem:[#allocation5 + $0x20] sm:$0xf]
        %v675 = vld [vmem:[#allocation5 + $0x24] sm:$0xff]
        %v676 = vld [vmem:[#allocation5 + $0x2c] sm:$0xf]
        %v677 = vld [vmem:[#allocation5 + $0x30] sm:$0xff]
        %v678 = vld [vmem:[#allocation5 + $0x38] sm:$0xf]
        %v679 = vld [vmem:[#allocation5 + $0x3c] sm:$0xff]
        %v680 = vld [vmem:[#allocation5 + $0x44] sm:$0xf]
        %v681 = vld [vmem:[#allocation5 + $0x48] sm:$0xff]
        %v682 = vld [vmem:[#allocation5 + $0x50] sm:$0xf]
        %v683 = vld [vmem:[#allocation5 + $0x54] sm:$0xff]
        %v684 = vld [vmem:[#allocation5 + $0x5c] sm:$0xf]
        %v685 = vld [vmem:[#allocation5 + $0x60] sm:$0xff]
        %v686 = vld [vmem:[#allocation5 + $0x68] sm:$0xf]
        %v687 = vld [vmem:[#allocation5 + $0x6c] sm:$0xff]
        %v688 = vld [vmem:[#allocation5 + $0x74] sm:$0xf]
        %v689 = vld [vmem:[#allocation5 + $0x78] sm:$0xff]
        %v690 = vld [vmem:[#allocation5 + $0x80] sm:$0xf]
        %v691 = vld [vmem:[#allocation5 + $0x84] sm:$0xff]
        %v692 = vld [vmem:[#allocation5 + $0x8c] sm:$0xf]
        %v693 = vld [vmem:[#allocation5 + $0x90] sm:$0xff]
        %v694 = vld [vmem:[#allocation5 + $0x98] sm:$0xf]
        %v695 = vld [vmem:[#allocation5 + $0x9c] sm:$0xff]
        %v696 = vld [vmem:[#allocation5 + $0xa4] sm:$0xf]
        %v697 = vld [vmem:[#allocation5 + $0xa8] sm:$0xff]
        %v698 = vld [vmem:[#allocation5 + $0xb0] sm:$0xf]
        %v699 = vld [vmem:[#allocation5 + $0xb4] sm:$0xff]
        %v700 = vld [vmem:[#allocation5 + $0xbc] sm:$0xf]
        %v701 = vld [vmem:[%s5] sm:$0x7]
        %v703 = vlaneseq
        %v704 = vshrl.u32 %v703, 7
        %v705 = vsub.s32 0, %v704
        %v706 = vrot.slane %v701, %v705
        %v707 = vlaneseq
        %v708 = vshrl.u32 %v707, 7
        %v709 = vsub.s32 1, %v708
        %v710 = vrot.slane %v701, %v709
        %v711 = vlaneseq
        %v712 = vshrl.u32 %v711, 7
        %v713 = vsub.s32 2, %v712
        %v714 = vrot.slane %v701, %v713
        %v750 = vunpack.c.l.b16 %v669
        %v751 = vunpack.c.h.b16 %v669
        %v752 = vunpack.c.l.b16 %v670
        %v753 = vunpack.c.l.b16 %v671
        %v754 = vunpack.c.h.b16 %v671
        %v755 = vunpack.c.l.b16 %v672
        %v756 = vunpack.c.l.b16 %v673
        %v757 = vunpack.c.h.b16 %v673
        %v758 = vunpack.c.l.b16 %v674
        %v759 = vunpack.c.l.b16 %v675
        %v760 = vunpack.c.h.b16 %v675
        %v761 = vunpack.c.l.b16 %v676
        %v762 = vunpack.c.l.b16 %v677
        %v763 = vunpack.c.h.b16 %v677
        %v764 = vunpack.c.l.b16 %v678
        %v765 = vunpack.c.l.b16 %v679
        %v766 = vunpack.c.h.b16 %v679
        %v767 = vunpack.c.l.b16 %v680
        %v768 = vunpack.c.l.b16 %v681
        %v769 = vunpack.c.h.b16 %v681
        %v770 = vunpack.c.l.b16 %v682
        %v771 = vunpack.c.l.b16 %v683
        %v772 = vunpack.c.h.b16 %v683
        %v773 = vunpack.c.l.b16 %v684
        %v774 = vunpack.c.l.b16 %v685
        %v775 = vunpack.c.h.b16 %v685
        %v776 = vunpack.c.l.b16 %v686
        %v777 = vunpack.c.l.b16 %v687
        %v778 = vunpack.c.h.b16 %v687
        %v779 = vunpack.c.l.b16 %v688
        %v780 = vunpack.c.l.b16 %v689
        %v781 = vunpack.c.h.b16 %v689
        %v782 = vunpack.c.l.b16 %v690
        %v783 = vunpack.c.l.b16 %v691
        %v784 = vunpack.c.h.b16 %v691
        %v785 = vunpack.c.l.b16 %v692
        %v786 = vunpack.c.l.b16 %v693
        %v787 = vunpack.c.h.b16 %v693
        %v788 = vunpack.c.l.b16 %v694
        %v789 = vunpack.c.l.b16 %v695
        %v790 = vunpack.c.h.b16 %v695
        %v791 = vunpack.c.l.b16 %v696
        %v792 = vunpack.c.l.b16 %v697
        %v793 = vunpack.c.h.b16 %v697
        %v794 = vunpack.c.l.b16 %v698
        %v795 = vunpack.c.l.b16 %v699
        %v796 = vunpack.c.h.b16 %v699
        %v797 = vunpack.c.l.b16 %v700
        %v798 = vpack.c.b16 %v753, %v750
        %v799 = vpack.c.b16 %v754, %v751
        %v800 = vpack.c.b16 %v755, %v752
        %v801 = vpack.c.b16 %v759, %v756
        %v802 = vpack.c.b16 %v760, %v757
        %v803 = vpack.c.b16 %v761, %v758
        %v804 = vpack.c.b16 %v765, %v762
        %v805 = vpack.c.b16 %v766, %v763
        %v806 = vpack.c.b16 %v767, %v764
        %v807 = vpack.c.b16 %v771, %v768
        %v808 = vpack.c.b16 %v772, %v769
        %v809 = vpack.c.b16 %v773, %v770
        %v810 = vpack.c.b16 %v777, %v774
        %v811 = vpack.c.b16 %v778, %v775
        %v812 = vpack.c.b16 %v779, %v776
        %v813 = vpack.c.b16 %v783, %v780
        %v814 = vpack.c.b16 %v784, %v781
        %v815 = vpack.c.b16 %v785, %v782
        %v816 = vpack.c.b16 %v789, %v786
        %v817 = vpack.c.b16 %v790, %v787
        %v818 = vpack.c.b16 %v791, %v788
        %v819 = vpack.c.b16 %v795, %v792
        %v820 = vpack.c.b16 %v796, %v793
        %v821 = vpack.c.b16 %v797, %v794
        %846 = vmatprep.subr.bf16.mxu0 %v820
        %847 = vmatpush1.bf16.msra.mxu0 %v819
        %848 = vmatprep.subr.bf16.mxu0 %v817
        %849 = vmatpush1.bf16.msra.mxu0 %v816
        %850 = vmatprep.subr.bf16.mxu0 %v814
        %851 = vmatpush1.bf16.msra.mxu0 %v813
        %852 = vmatprep.subr.bf16.mxu0 %v811
        %853 = vmatpush1.bf16.msra.mxu0 %v810
        %854 = vmatprep.subr.bf16.mxu0 %v808
        %855 = vmatpush1.bf16.msra.mxu0 %v807
        %856 = vmatprep.subr.bf16.mxu0 %v805
        %857 = vmatpush1.bf16.msra.mxu0 %v804
        %858 = vmatprep.subr.bf16.mxu0 %v802
        %859 = vmatpush1.bf16.msra.mxu0 %v801
        %860 = vmatprep.subr.bf16.mxu0 %v799
        %861 = vmatpush1.bf16.msra.mxu0 %v798
        %862 = vmatprep.subr.bf16.mxu0 0
        %863 = vmatpush2.bf16.msra.mxu0 0
        %864 = vmatprep.subr.bf16.mxu0 0
        %865 = vmatpush2.bf16.msra.mxu0 0
        %866 = vmatprep.subr.bf16.mxu0 0
        %867 = vmatpush2.bf16.msra.mxu0 0
        %868 = vmatprep.subr.bf16.mxu0 0
        %869 = vmatpush2.bf16.msra.mxu0 0
        %870 = vmatprep.subr.bf16.mxu0 0
        %871 = vmatpush2.bf16.msra.mxu0 0
        %872 = vmatprep.subr.bf16.mxu0 0
        %873 = vmatpush2.bf16.msra.mxu0 0
        %874 = vmatprep.subr.bf16.mxu0 0
        %875 = vmatpush2.bf16.msra.mxu0 0
        %876 = vmatprep.subr.bf16.mxu0 0
        %877 = vmatpush2.bf16.msra.mxu0 0
        %878 = vmatprep.mubr.bf16.mxu0 0
        %879 = vmatmul.mubr.bf16.gmra.mxu0 %v410
        %v880 = vpop.f32.mrf.mxu0
        %v881 = vadd.f32 %v706, %v880
        %v882 = vpop.f32.mrf.mxu0
        %v883 = vadd.f32 %v710, %v882
        %v884 = vpop.f32.mrf.mxu0
        %v885 = vpop.f32.mrf.mxu0
        %886 = vdwg.mxu0
        %887 = vmatprep.subr.bf16.mxu0 0
        %888 = vmatpush1.bf16.msra.mxu0 %v821
        %889 = vmatprep.subr.bf16.mxu0 0
        %890 = vmatpush1.bf16.msra.mxu0 %v818
        %891 = vmatprep.subr.bf16.mxu0 0
        %892 = vmatpush1.bf16.msra.mxu0 %v815
        %893 = vmatprep.subr.bf16.mxu0 0
        %894 = vmatpush1.bf16.msra.mxu0 %v812
        %895 = vmatprep.subr.bf16.mxu0 0
        %896 = vmatpush1.bf16.msra.mxu0 %v809
        %897 = vmatprep.subr.bf16.mxu0 0
        %898 = vmatpush1.bf16.msra.mxu0 %v806
        %899 = vmatprep.subr.bf16.mxu0 0
        %900 = vmatpush1.bf16.msra.mxu0 %v803
        %901 = vmatprep.subr.bf16.mxu0 0
        %902 = vmatpush1.bf16.msra.mxu0 %v800
        %903 = vmatprep.subr.bf16.mxu0 0
        %904 = vmatpush2.bf16.msra.mxu0 0
        %905 = vmatprep.subr.bf16.mxu0 0
        %906 = vmatpush2.bf16.msra.mxu0 0
        %907 = vmatprep.subr.bf16.mxu0 0
        %908 = vmatpush2.bf16.msra.mxu0 0
        %909 = vmatprep.subr.bf16.mxu0 0
        %910 = vmatpush2.bf16.msra.mxu0 0
        %911 = vmatprep.subr.bf16.mxu0 0
        %912 = vmatpush2.bf16.msra.mxu0 0
        %913 = vmatprep.subr.bf16.mxu0 0
        %914 = vmatpush2.bf16.msra.mxu0 0
        %915 = vmatprep.subr.bf16.mxu0 0
        %916 = vmatpush2.bf16.msra.mxu0 0
        %917 = vmatprep.subr.bf16.mxu0 0
        %918 = vmatpush2.bf16.msra.mxu0 0
        %919 = vmatprep.mubr.bf16.mxu0 0
        %920 = vmatmul.mubr.bf16.gmra.mxu0 %v410
        %v921 = vpop.f32.mrf.mxu0
        %v922 = vadd.f32 %v714, %v921
        %v923 = vpop.f32.mrf.mxu0
        %v924 = vpop.f32.mrf.mxu0
        %v925 = vpop.f32.mrf.mxu0
        %926 = vdwg.mxu0
        %v927 = vadd.f32 %v623, %v881
        %v928 = vxor.u32 %v927, 2147483648
        %v929 = vmul.f32 %v928, 1.442695
        %v930 = vpow.pop %v929
        %v931 = vadd.f32 %v930, 1.0
        %v932 = vrcp.pop %v931
        %v933 = vmul.f32 1.0, %v932
        %v934 = vadd.f32 %v625, %v883
        %v935 = vxor.u32 %v934, 2147483648
        %v936 = vmul.f32 %v935, 1.442695
        %v937 = vpow.pop %v936
        %v938 = vadd.f32 %v937, 1.0
        %v939 = vrcp.pop %v938
        %v940 = vmul.f32 1.0, %v939
        %v941 = vmul.f32 %v933, %v922
        %v942 = vadd.f32 %v664, %v941
        %v943 = vtanh.pop %v942
        %v944 = vsub.f32 1.0, %v940
        %v945 = vmul.f32 %v944, %v943
        %v946 = vmul.f32 %v940, %v409
        %v947 = vadd.f32 %v945, %v946
        %948 = vst [vmem:[%s406] sm:$0xff] %v947
        %v949 = vpack.c.bf16 %v947, %v947
        %v950 = vld [vmem:[%s355] sm:$0xff]
        %v951 = vld [vmem:[%s355 + $0x8] sm:$0xff]
        %v952 = vld [vmem:[%s355 + $0x10] sm:$0xff]
        %v953 = vld [vmem:[%s355 + $0x18] sm:$0xff]
        %v954 = vld [vmem:[%s355 + $0x20] sm:$0xff]
        %v955 = vld [vmem:[%s355 + $0x28] sm:$0xff]
        %v956 = vld [vmem:[%s355 + $0x30] sm:$0xff]
        %v957 = vld [vmem:[%s355 + $0x38] sm:$0xff]
        %v958 = vld [vmem:[%s355 + $0x40] sm:$0xff]
        %v959 = vld [vmem:[%s355 + $0x48] sm:$0xff]
        %v960 = vld [vmem:[%s355 + $0x50] sm:$0xff]
        %v961 = vld [vmem:[%s355 + $0x58] sm:$0xff]
        %v962 = vld [vmem:[%s355 + $0x60] sm:$0xff]
        %v963 = vld [vmem:[%s355 + $0x68] sm:$0xff]
        %v964 = vld [vmem:[%s355 + $0x70] sm:$0xff]
        %v965 = vld [vmem:[%s355 + $0x78] sm:$0xff]
        %v966 = vld [vmem:[%s355 + $0x80] sm:$0xff]
        %v967 = vld [vmem:[%s355 + $0x88] sm:$0xff]
        %v968 = vld [vmem:[%s355 + $0x90] sm:$0xff]
        %v969 = vld [vmem:[%s355 + $0x98] sm:$0xff]
        %v970 = vld [vmem:[%s355 + $0xa0] sm:$0xff]
        %v971 = vld [vmem:[%s355 + $0xa8] sm:$0xff]
        %v972 = vld [vmem:[%s355 + $0xb0] sm:$0xff]
        %v973 = vld [vmem:[%s355 + $0xb8] sm:$0xff]
        %v974 = vld [vmem:[%s355 + $0xc0] sm:$0xff]
        %v975 = vld [vmem:[%s355 + $0xc8] sm:$0xff]
        %v976 = vld [vmem:[%s355 + $0xd0] sm:$0xff]
        %v977 = vld [vmem:[%s355 + $0xd8] sm:$0xff]
        %v978 = vld [vmem:[%s355 + $0xe0] sm:$0xff]
        %v979 = vld [vmem:[%s355 + $0xe8] sm:$0xff]
        %v980 = vld [vmem:[%s355 + $0xf0] sm:$0xff]
        %v981 = vld [vmem:[%s355 + $0xf8] sm:$0xff]
        %v982 = vld [vmem:[%s401] sm:$0xf]
        %v984 = vlaneseq
        %v985 = vshrl.u32 %v984, 7
        %v986 = vsub.s32 0, %v985
        %v987 = vrot.slane %v982, %v986
        %v988 = vlaneseq
        %v989 = vshrl.u32 %v988, 7
        %v990 = vsub.s32 1, %v989
        %v991 = vrot.slane %v982, %v990
        %v992 = vlaneseq
        %v993 = vshrl.u32 %v992, 7
        %v994 = vsub.s32 2, %v993
        %v995 = vrot.slane %v982, %v994
        %v996 = vlaneseq
        %v997 = vshrl.u32 %v996, 7
        %v998 = vsub.s32 3, %v997
        %v999 = vrot.slane %v982, %v998
        %v1036 = vunpack.c.l.b16 %v950
        %v1037 = vunpack.c.h.b16 %v950
        %v1038 = vunpack.c.l.b16 %v951
        %v1039 = vunpack.c.h.b16 %v951
        %v1040 = vunpack.c.l.b16 %v952
        %v1041 = vunpack.c.h.b16 %v952
        %v1042 = vunpack.c.l.b16 %v953
        %v1043 = vunpack.c.h.b16 %v953
        %v1044 = vunpack.c.l.b16 %v954
        %v1045 = vunpack.c.h.b16 %v954
        %v1046 = vunpack.c.l.b16 %v955
        %v1047 = vunpack.c.h.b16 %v955
        %v1048 = vunpack.c.l.b16 %v956
        %v1049 = vunpack.c.h.b16 %v956
        %v1050 = vunpack.c.l.b16 %v957
        %v1051 = vunpack.c.h.b16 %v957
        %v1052 = vunpack.c.l.b16 %v958
        %v1053 = vunpack.c.h.b16 %v958
        %v1054 = vunpack.c.l.b16 %v959
        %v1055 = vunpack.c.h.b16 %v959
        %v1056 = vunpack.c.l.b16 %v960
        %v1057 = vunpack.c.h.b16 %v960
        %v1058 = vunpack.c.l.b16 %v961
        %v1059 = vunpack.c.h.b16 %v961
        %v1060 = vunpack.c.l.b16 %v962
        %v1061 = vunpack.c.h.b16 %v962
        %v1062 = vunpack.c.l.b16 %v963
        %v1063 = vunpack.c.h.b16 %v963
        %v1064 = vunpack.c.l.b16 %v964
        %v1065 = vunpack.c.h.b16 %v964
        %v1066 = vunpack.c.l.b16 %v965
        %v1067 = vunpack.c.h.b16 %v965
        %v1068 = vunpack.c.l.b16 %v966
        %v1069 = vunpack.c.h.b16 %v966
        %v1070 = vunpack.c.l.b16 %v967
        %v1071 = vunpack.c.h.b16 %v967
        %v1072 = vunpack.c.l.b16 %v968
        %v1073 = vunpack.c.h.b16 %v968
        %v1074 = vunpack.c.l.b16 %v969
        %v1075 = vunpack.c.h.b16 %v969
        %v1076 = vunpack.c.l.b16 %v970
        %v1077 = vunpack.c.h.b16 %v970
        %v1078 = vunpack.c.l.b16 %v971
        %v1079 = vunpack.c.h.b16 %v971
        %v1080 = vunpack.c.l.b16 %v972
        %v1081 = vunpack.c.h.b16 %v972
        %v1082 = vunpack.c.l.b16 %v973
        %v1083 = vunpack.c.h.b16 %v973
        %v1084 = vunpack.c.l.b16 %v974
        %v1085 = vunpack.c.h.b16 %v974
        %v1086 = vunpack.c.l.b16 %v975
        %v1087 = vunpack.c.h.b16 %v975
        %v1088 = vunpack.c.l.b16 %v976
        %v1089 = vunpack.c.h.b16 %v976
        %v1090 = vunpack.c.l.b16 %v977
        %v1091 = vunpack.c.h.b16 %v977
        %v1092 = vunpack.c.l.b16 %v978
        %v1093 = vunpack.c.h.b16 %v978
        %v1094 = vunpack.c.l.b16 %v979
        %v1095 = vunpack.c.h.b16 %v979
        %v1096 = vunpack.c.l.b16 %v980
        %v1097 = vunpack.c.h.b16 %v980
        %v1098 = vunpack.c.l.b16 %v981
        %v1099 = vunpack.c.h.b16 %v981
        %v1100 = vpack.c.b16 %v1040, %v1036
        %v1101 = vpack.c.b16 %v1041, %v1037
        %v1102 = vpack.c.b16 %v1042, %v1038
        %v1103 = vpack.c.b16 %v1043, %v1039
        %v1104 = vpack.c.b16 %v1048, %v1044
        %v1105 = vpack.c.b16 %v1049, %v1045
        %v1106 = vpack.c.b16 %v1050, %v1046
        %v1107 = vpack.c.b16 %v1051, %v1047
        %v1108 = vpack.c.b16 %v1056, %v1052
        %v1109 = vpack.c.b16 %v1057, %v1053
        %v1110 = vpack.c.b16 %v1058, %v1054
        %v1111 = vpack.c.b16 %v1059, %v1055
        %v1112 = vpack.c.b16 %v1064, %v1060
        %v1113 = vpack.c.b16 %v1065, %v1061
        %v1114 = vpack.c.b16 %v1066, %v1062
        %v1115 = vpack.c.b16 %v1067, %v1063
        %v1116 = vpack.c.b16 %v1072, %v1068
        %v1117 = vpack.c.b16 %v1073, %v1069
        %v1118 = vpack.c.b16 %v1074, %v1070
        %v1119 = vpack.c.b16 %v1075, %v1071
        %v1120 = vpack.c.b16 %v1080, %v1076
        %v1121 = vpack.c.b16 %v1081, %v1077
        %v1122 = vpack.c.b16 %v1082, %v1078
        %v1123 = vpack.c.b16 %v1083, %v1079
        %v1124 = vpack.c.b16 %v1088, %v1084
        %v1125 = vpack.c.b16 %v1089, %v1085
        %v1126 = vpack.c.b16 %v1090, %v1086
        %v1127 = vpack.c.b16 %v1091, %v1087
        %v1128 = vpack.c.b16 %v1096, %v1092
        %v1129 = vpack.c.b16 %v1097, %v1093
        %v1130 = vpack.c.b16 %v1098, %v1094
        %v1131 = vpack.c.b16 %v1099, %v1095
        %1164 = vmatprep.subr.bf16.mxu0 %v1129
        %1165 = vmatpush1.bf16.msra.mxu0 %v1128
        %1166 = vmatprep.subr.bf16.mxu0 %v1125
        %1167 = vmatpush1.bf16.msra.mxu0 %v1124
        %1168 = vmatprep.subr.bf16.mxu0 %v1121
        %1169 = vmatpush1.bf16.msra.mxu0 %v1120
        %1170 = vmatprep.subr.bf16.mxu0 %v1117
        %1171 = vmatpush1.bf16.msra.mxu0 %v1116
        %1172 = vmatprep.subr.bf16.mxu0 %v1113
        %1173 = vmatpush1.bf16.msra.mxu0 %v1112
        %1174 = vmatprep.subr.bf16.mxu0 %v1109
        %1175 = vmatpush1.bf16.msra.mxu0 %v1108
        %1176 = vmatprep.subr.bf16.mxu0 %v1105
        %1177 = vmatpush1.bf16.msra.mxu0 %v1104
        %1178 = vmatprep.subr.bf16.mxu0 %v1101
        %1179 = vmatpush1.bf16.msra.mxu0 %v1100
        %1180 = vmatprep.subr.bf16.mxu0 0
        %1181 = vmatpush2.bf16.msra.mxu0 0
        %1182 = vmatprep.subr.bf16.mxu0 0
        %1183 = vmatpush2.bf16.msra.mxu0 0
        %1184 = vmatprep.subr.bf16.mxu0 0
        %1185 = vmatpush2.bf16.msra.mxu0 0
        %1186 = vmatprep.subr.bf16.mxu0 0
        %1187 = vmatpush2.bf16.msra.mxu0 0
        %1188 = vmatprep.subr.bf16.mxu0 0
        %1189 = vmatpush2.bf16.msra.mxu0 0
        %1190 = vmatprep.subr.bf16.mxu0 0
        %1191 = vmatpush2.bf16.msra.mxu0 0
        %1192 = vmatprep.subr.bf16.mxu0 0
        %1193 = vmatpush2.bf16.msra.mxu0 0
        %1194 = vmatprep.subr.bf16.mxu0 0
        %1195 = vmatpush2.bf16.msra.mxu0 0
        %1196 = vmatprep.mubr.bf16.mxu0 0
        %1197 = vmatmul.mubr.bf16.gmra.mxu0 %v949
        %v1198 = vpop.f32.mrf.mxu0
        %v1199 = vadd.f32 %v987, %v1198
        %v1200 = vpop.f32.mrf.mxu0
        %v1201 = vadd.f32 %v991, %v1200
        %v1202 = vpop.f32.mrf.mxu0
        %v1203 = vpop.f32.mrf.mxu0
        %1204 = vdwg.mxu0
        %1205 = vmatprep.subr.bf16.mxu0 %v1131
        %1206 = vmatpush1.bf16.msra.mxu0 %v1130
        %1207 = vmatprep.subr.bf16.mxu0 %v1127
        %1208 = vmatpush1.bf16.msra.mxu0 %v1126
        %1209 = vmatprep.subr.bf16.mxu0 %v1123
        %1210 = vmatpush1.bf16.msra.mxu0 %v1122
        %1211 = vmatprep.subr.bf16.mxu0 %v1119
        %1212 = vmatpush1.bf16.msra.mxu0 %v1118
        %1213 = vmatprep.subr.bf16.mxu0 %v1115
        %1214 = vmatpush1.bf16.msra.mxu0 %v1114
        %1215 = vmatprep.subr.bf16.mxu0 %v1111
        %1216 = vmatpush1.bf16.msra.mxu0 %v1110
        %1217 = vmatprep.subr.bf16.mxu0 %v1107
        %1218 = vmatpush1.bf16.msra.mxu0 %v1106
        %1219 = vmatprep.subr.bf16.mxu0 %v1103
        %1220 = vmatpush1.bf16.msra.mxu0 %v1102
        %1221 = vmatprep.subr.bf16.mxu0 0
        %1222 = vmatpush2.bf16.msra.mxu0 0
        %1223 = vmatprep.subr.bf16.mxu0 0
        %1224 = vmatpush2.bf16.msra.mxu0 0
        %1225 = vmatprep.subr.bf16.mxu0 0
        %1226 = vmatpush2.bf16.msra.mxu0 0
        %1227 = vmatprep.subr.bf16.mxu0 0
        %1228 = vmatpush2.bf16.msra.mxu0 0
        %1229 = vmatprep.subr.bf16.mxu0 0
        %1230 = vmatpush2.bf16.msra.mxu0 0
        %1231 = vmatprep.subr.bf16.mxu0 0
        %1232 = vmatpush2.bf16.msra.mxu0 0
        %1233 = vmatprep.subr.bf16.mxu0 0
        %1234 = vmatpush2.bf16.msra.mxu0 0
        %1235 = vmatprep.subr.bf16.mxu0 0
        %1236 = vmatpush2.bf16.msra.mxu0 0
        %1237 = vmatprep.mubr.bf16.mxu0 0
        %1238 = vmatmul.mubr.bf16.gmra.mxu0 %v949
        %v1239 = vpop.f32.mrf.mxu0
        %v1240 = vadd.f32 %v995, %v1239
        %v1241 = vpop.f32.mrf.mxu0
        %v1242 = vadd.f32 %v999, %v1241
        %v1243 = vpop.f32.mrf.mxu0
        %v1244 = vpop.f32.mrf.mxu0
        %1245 = vdwg.mxu0
        %1246 = vst [vmem:[%s391] sm:$0xff] %v1199
        %1247 = vst [vmem:[%s391 + $0x8] sm:$0xff] %v1201
        %1248 = vst [vmem:[%s391 + $0x10] sm:$0xff] %v1240
        %1249 = vst [vmem:[%s391 + $0x18] sm:$0xff] %v1242
        %s1250 = sand.u32 %s212, 1
        %s1251 = scalar_lea.sflag [#allocation4], %s1250
        %s1252 = sand.u32 %s212, 1
        %s1253 = smul.addr %s1252, 32
        %s1254 = scalar_lea.vmem [#allocation8], %s1253
        %p1255 = scmp.lt.s32.totalorder %s26, 1
        %s1256 = scalar_select %p1255, %s26, 1
        %s1257 = smul.addr %s1256, 8
        %s1258 = scalar_lea.vmem %s9, %s1257
        // Predicated region
        $region65: #{decoder_forward.1} parent=51 // pred_check
          %p1259 = pneg %p222
        $region66: #{decoder_forward.1} parent=51 // pred_check_branch
          %1261 = sbr.rel (%p1259) target = $region68
        $region67: #{decoder_forward.1} parent=51 // pred_region
          %s1262 = smul.u32 4, %s26
          %s1264 = ssub.s32 512, 512
          %1265 = vsyncadd %s1251, %s1264
          %s1266 = smul.addr %s1262, 128
          %s1267 = scalar_lea.hbm %s8, %s1266
          %s1269 = sshll.u32 %s1254, 4
          %s1270 = int_to_ptr.vmem [resolvable:$true] %s1269
          %1272 = dma.vmem_to_hbm [thread:$0]  %s1270, 512, %s1267, %s1251
        $region68: #{decoder_forward.1} parent=51 // pred_fallthru
          _
        // Predicated region
        $region69: #{decoder_forward.1} parent=51 // pred_check
          %p1273 = pneg %p248
        $region70: #{decoder_forward.1} parent=51 // pred_check_branch
          %1275 = sbr.rel (%p1273) target = $region72
        $region71: #{decoder_forward.1} parent=51 // pred_region
          _
        $region72: #{decoder_forward.1} parent=51 // pred_fallthru
          _
      $region52: #{decoder_forward.1} parent=5 // pred_fallthru
        _
      %p1276 = scmp.le.s32.totalorder 2, %s21
      // Predicated region
      $region73: #{decoder_forward.1} parent=5 // pred_check
        %p1277 = pneg %p1276
      $region74: #{decoder_forward.1} parent=5 // pred_check_branch
        %1279 = sbr.rel (%p1277) target = $region76
      $region75: #{decoder_forward.1} parent=5 // pred_region
        %s1280 = ssub.s32 %s21, 2
        // Predicated region
        $region77: #{decoder_forward.1} parent=75 // pred_check
          %p1281 = pneg %p228
        $region78: #{decoder_forward.1} parent=75 // pred_check_branch
          %1283 = sbr.rel (%p1281) target = $region80
        $region79: #{decoder_forward.1} parent=75 // pred_region
          %s1284 = sand.u32 %s213, 1
          %s1285 = scalar_lea.sflag [#allocation4], %s1284
          %s1286 = sand.u32 %s213, 1
          %s1287 = smul.addr %s1286, 32
          %s1288 = scalar_lea.vmem [#allocation8], %s1287
          %1289 = dma.done %s1285, 512
        $region80: #{decoder_forward.1} parent=75 // pred_fallthru
          _
        // Predicated region
        $region81: #{decoder_forward.1} parent=75 // pred_check
          %p1290 = pneg %p254
        $region82: #{decoder_forward.1} parent=75 // pred_check_branch
          %1292 = sbr.rel (%p1290) target = $region84
        $region83: #{decoder_forward.1} parent=75 // pred_region
          %p1293 = scmp.lt.s32.totalorder %s27, 1
          %s1294 = scalar_select %p1293, %s27, 1
          %s1295 = smul.addr %s1294, 8
          %s1296 = scalar_lea.vmem %s9, %s1295
        $region84: #{decoder_forward.1} parent=75 // pred_fallthru
          _
      $region76: #{decoder_forward.1} parent=5 // pred_fallthru
        _
    $region6: #{decoder_forward.1} parent=1 // loop_footer
      %s25 = sadd.s32 1, %s21
    $region7: #{decoder_forward.1} parent=1 // loop_footer_branch
      %20 = sbr.rel target = $region3
    $region8: #{decoder_forward.1} parent=1 // loop_exit
      _
    %1297 = vsyncpa [#allocation3], 1
    %s1298 = scalar_lea.sflag [#allocation3], 1
    %1299 = vsyncpa %s1298, 1
    %1300 = vsyncpa [#allocation6], 1
    %1301 = vsyncpa [#allocation4], 1
    %s1302 = scalar_lea.sflag [#allocation4], 1
    %1303 = vsyncpa %s1302, 1

</llo_original>
